<compile_context>
chip_gen: v7x
topology: tpu7x:2x2x1
jax: 0.10.0
libtpu: 0.0.40
codegen_flags: <defaults>
</compile_context>

<pallas_src>
import itertools
import math

import jax
import jax.numpy as jnp
from jax.experimental import pallas as pl
from jax.experimental.pallas import tpu as pltpu

NEG_SLOPE = 0.01               # nn.LeakyReLU default
BN_EPS = 1e-5                  # nn.BatchNorm1d default
LANE = 128
VMEM_LIMIT = 32 * 1024 * 1024  # explicit scoped-VMEM budget, safe on v5e/v6e/v7x


# ----------------------------------------------------------------------------
# small helpers
# ----------------------------------------------------------------------------
def _round_up(n, m):
    return ((n + m - 1) // m) * m


def _leaky(y):
    return jnp.where(y > 0, y, NEG_SLOPE * y)


def _row_tiling(n, max_tile=512):
    tile = min(max_tile, _round_up(n, 8))
    n_pad = _round_up(n, tile)
    return tile, n_pad


def _pad_rows(x, n_pad):
    n = x.shape[0]
    if n_pad == n:
        return x
    return jnp.pad(x, ((0, n_pad - n),) + ((0, 0),) * (x.ndim - 1))


def _const_spec(shape):
    nd = len(shape)
    return pl.BlockSpec(shape, lambda i, _nd=nd: (0,) * _nd)


# ----------------------------------------------------------------------------
# Fused stage kernel:  (optional prev-BN scale/shift) -> matmul -> LeakyReLU
#                      + per-tile partial BN statistics of the output
# ----------------------------------------------------------------------------
def _make_stage_kernel(n_real, tile, normalize_input):
    def kernel(*refs):
        if normalize_input:
            x_ref, scale_ref, shift_ref, w_ref, b_ref, y_ref, st_ref = refs
            x = x_ref[...] * scale_ref[...] + shift_ref[...]
        else:
            x_ref, w_ref, b_ref, y_ref, st_ref = refs
            x = x_ref[...]
        y = _leaky(jnp.dot(x, w_ref[...], preferred_element_type=jnp.float32)
                   + b_ref[...])
        y_ref[...] = y

        # mask away tile-padding rows so the global BN statistics stay exact
        row = (jax.lax.broadcasted_iota(jnp.int32, (tile, 1), 0)
               + pl.program_id(0) * tile)
        m = (row < n_real).astype(jnp.float32)
        ym = y * m
        s0 = jnp.sum(ym, axis=0, keepdims=True)        # [1, F]  sum
        s1 = jnp.sum(ym * y, axis=0, keepdims=True)    # [1, F]  sum of squares
        st_ref[...] = jnp.concatenate([s0, s1], axis=0)[None]
    return kernel


def fused_linear_stage(x, w, b, scale=None, shift=None, max_tile=512):
    """y = LeakyReLU((x*scale + shift) @ w + b), row-tiled; returns (y, partial_stats)."""
    n, f_in = x.shape
    f_out = w.shape[1]
    tile, n_pad = _row_tiling(n, max_tile)
    xp = _pad_rows(x, n_pad)
    n_tiles = n_pad // tile
    normalize = scale is not None

    in_arrays = [xp]
    in_specs = [pl.BlockSpec((tile, f_in), lambda i: (i, 0))]
    if normalize:
        in_arrays += [scale, shift]
        in_specs += [_const_spec((1, f_in)), _const_spec((1, f_in))]
    in_arrays += [w, b]
    in_specs += [_const_spec((f_in, f_out)), _const_spec((1, f_out))]

    y, st = pl.pallas_call(
        _make_stage_kernel(n, tile, normalize),
        grid=(n_tiles,),
        in_specs=in_specs,
        out_specs=[pl.BlockSpec((tile, f_out), lambda i: (i, 0)),
                   pl.BlockSpec((1, 2, f_out), lambda i: (i, 0, 0))],
        out_shape=[jax.ShapeDtypeStruct((n_pad, f_out), jnp.float32),
                   jax.ShapeDtypeStruct((n_tiles, 2, f_out), jnp.float32)],
        compiler_params=pltpu.CompilerParams(
            dimension_semantics=("parallel",), vmem_limit_bytes=VMEM_LIMIT),
    )(*in_arrays)
    return (y[:n] if n_pad != n else y), st


def _bn_scale_shift(stats, n, gamma, beta):
    """Reduce per-tile stats -> BN fold-in (scale, shift) for the next stage."""
    s = jnp.sum(stats[:, 0, :], axis=0)
    ss = jnp.sum(stats[:, 1, :], axis=0)
    mean = s / n
    var = jnp.maximum(ss / n - mean * mean, 0.0)     # biased var (BN training)
    inv = jax.lax.rsqrt(var + BN_EPS)
    scale = gamma * inv
    shift = beta - mean * scale
    return scale.reshape(1, -1), shift.reshape(1, -1)


# ----------------------------------------------------------------------------
# g_fc3 + LeakyReLU + sum over the joint-pair (comb) axis, fused
# ----------------------------------------------------------------------------
def _g3_sum_kernel(x_ref, scale_ref, shift_ref, w_ref, b_ref, o_ref):
    tg, comb, f_in = x_ref.shape
    x = x_ref[...].reshape(tg * comb, f_in) * scale_ref[...] + shift_ref[...]
    y = _leaky(jnp.dot(x, w_ref[...], preferred_element_type=jnp.float32)
               + b_ref[...])
    o_ref[...] = jnp.sum(y.reshape(tg, comb, -1), axis=1)


def g3_sum_stage(y2, scale, shift, w, b, groups, comb, max_tile=128):
    f_in = y2.shape[1]
    f_out = w.shape[1]
    x3 = y2.reshape(groups, comb, f_in)
    tile, g_pad = _row_tiling(groups, max_tile)
    x3 = _pad_rows(x3, g_pad)
    n_tiles = g_pad // tile
    out = pl.pallas_call(
        _g3_sum_kernel,
        grid=(n_tiles,),
        in_specs=[pl.BlockSpec((tile, comb, f_in), lambda i: (i, 0, 0)),
                  _const_spec((1, f_in)), _const_spec((1, f_in)),
                  _const_spec((f_in, f_out)), _const_spec((1, f_out))],
        out_specs=pl.BlockSpec((tile, f_out), lambda i: (i, 0)),
        out_shape=jax.ShapeDtypeStruct((g_pad, f_out), jnp.float32),
        compiler_params=pltpu.CompilerParams(
            dimension_semantics=("parallel",), vmem_limit_bytes=VMEM_LIMIT),
    )(x3, scale, shift, w, b)
    return out[:groups] if g_pad != groups else out


# ----------------------------------------------------------------------------
# f_fc3 + LeakyReLU fused with the LSTM layer-0 input projection
#   xp = LeakyReLU(BN(z) @ Wf3 + bf3) @ Wih0[:H] + data @ Wih0[H:] + b0
# ----------------------------------------------------------------------------
def _f3_proj_kernel(x_ref, scale_ref, shift_ref, w3_ref, b3_ref,
                    data_ref, wx_ref, wd_ref, b0_ref, o_ref):
    z = x_ref[...] * scale_ref[...] + shift_ref[...]
    xf = _leaky(jnp.dot(z, w3_ref[...], preferred_element_type=jnp.float32)
                + b3_ref[...])
    xp = (jnp.dot(xf, wx_ref[...], preferred_element_type=jnp.float32)
          + jnp.dot(data_ref[...], wd_ref[...], preferred_element_type=jnp.float32)
          + b0_ref[...])
    o_ref[...] = xp


def f3_proj_stage(y2, scale, shift, w3p, b3p, data_flat, wxp, wdp, b0p,
                  max_tile=512):
    n, f_in = y2.shape
    hp = w3p.shape[1]
    g = wxp.shape[1]
    din = data_flat.shape[1]
    tile, n_pad = _row_tiling(n, max_tile)
    y2p = _pad_rows(y2, n_pad)
    dp = _pad_rows(data_flat, n_pad)
    n_tiles = n_pad // tile
    out = pl.pallas_call(
        _f3_proj_kernel,
        grid=(n_tiles,),
        in_specs=[pl.BlockSpec((tile, f_in), lambda i: (i, 0)),
                  _const_spec((1, f_in)), _const_spec((1, f_in)),
                  _const_spec((f_in, hp)), _const_spec((1, hp)),
                  pl.BlockSpec((tile, din), lambda i: (i, 0)),
                  _const_spec((hp, g)), _const_spec((din, g)),
                  _const_spec((1, g))],
        out_specs=pl.BlockSpec((tile, g), lambda i: (i, 0)),
        out_shape=jax.ShapeDtypeStruct((n_pad, g), jnp.float32),
        compiler_params=pltpu.CompilerParams(
            dimension_semantics=("parallel",), vmem_limit_bytes=VMEM_LIMIT),
    )(y2p, scale, shift, w3p, b3p, dp, wxp, wdp, b0p)
    return out[:n] if n_pad != n else out


# ----------------------------------------------------------------------------
# 2-layer LSTM, one kernel, fori_loop over T.  Layer-0 input projections (xp,
# including bias) are precomputed; gates/hidden are padded to 128 lanes so all
# gate slices are 128-aligned and all stores are lane-dense.  Padded gate
# columns have zero weight/bias -> padded h/c stay exactly 0.
# ----------------------------------------------------------------------------
def _lstm2_kernel(xp_ref, whh0_ref, wih1_ref, whh1_ref, b1_ref, o_ref):
    T = xp_ref.shape[0]
    B = xp_ref.shape[1]
    Hp = o_ref.shape[2]

    whh0 = whh0_ref[...]
    wih1 = wih1_ref[...]
    whh1 = whh1_ref[...]
    b1 = b1_ref[...]

    def gates(g):
        i = jax.nn.sigmoid(g[:, 0 * Hp:1 * Hp])
        f = jax.nn.sigmoid(g[:, 1 * Hp:2 * Hp])
        c = jnp.tanh(g[:, 2 * Hp:3 * Hp])
        o = jax.nn.sigmoid(g[:, 3 * Hp:4 * Hp])
        return i, f, c, o

    def step(t, carry):
        h0, c0, h1, c1 = carry
        g0 = xp_ref[t] + jnp.dot(h0, whh0, preferred_element_type=jnp.float32)
        i0, f0, gg0, o0 = gates(g0)
        c0n = f0 * c0 + i0 * gg0
        h0n = o0 * jnp.tanh(c0n)
        g1 = (jnp.dot(h0n, wih1, preferred_element_type=jnp.float32)
              + jnp.dot(h1, whh1, preferred_element_type=jnp.float32) + b1)
        i1, f1, gg1, o1 = gates(g1)
        c1n = f1 * c1 + i1 * gg1
        h1n = o1 * jnp.tanh(c1n)
        o_ref[t] = h1n
        return h0n, c0n, h1n, c1n

    z = jnp.zeros((B, Hp), jnp.float32)
    jax.lax.fori_loop(0, T, step, (z, z, z, z))


def lstm2_fused(xp_tm, whh0p, wih1p, whh1p, b1p):
    # TODO(synk): for very long T*B the whole xp slab is kept in VMEM; stream it
    # with a manual double buffer if it ever exceeds the VMEM budget.
    T, B, G = xp_tm.shape
    Hp = G // 4
    vm = pl.BlockSpec(memory_space=pltpu.MemorySpace.VMEM)
    return pl.pallas_call(
        _lstm2_kernel,
        in_specs=[vm] * 5,
        out_specs=vm,
        out_shape=jax.ShapeDtypeStruct((T, B, Hp), jnp.float32),
        compiler_params=pltpu.CompilerParams(vmem_limit_bytes=VMEM_LIMIT),
    )(xp_tm, whh0p, wih1p, whh1p, b1p)


# ----------------------------------------------------------------------------
# Head: hidden1 + BN over the valid (packed) rows + LeakyReLU + hidden2 +
# per-sample mean over the last third of valid timesteps.  batch_len in SMEM.
# ----------------------------------------------------------------------------
def _head_kernel(len_ref, x_ref, w1_ref, b1_ref, g1_ref, be1_ref,
                 w2_ref, b2_ref, o_ref):
    T, B, Hp = x_ref.shape
    x = x_ref[...].reshape(T * B, Hp)
    y = jnp.dot(x, w1_ref[...], preferred_element_type=jnp.float32) + b1_ref[...]

    rows = jax.lax.broadcasted_iota(jnp.int32, (T * B, 1), 0)
    t_idx = rows // B
    b_idx = rows - t_idx * B

    L_flat = jnp.zeros((T * B, 1), jnp.int32)
    count = 0.0
    for b in range(B):                       # static batch dim, unrolled
        Lb = len_ref[b]
        L_flat = jnp.where(b_idx == b, Lb, L_flat)
        count = count + Lb.astype(jnp.float32)
    valid = (t_idx < L_flat).astype(jnp.float32)

    # BatchNorm (training statistics) over the packed/valid rows only
    mean = jnp.sum(y * valid, axis=0, keepdims=True) / count
    var = jnp.sum(((y - mean) ** 2) * valid, axis=0, keepdims=True) / count
    z = (y - mean) * jax.lax.rsqrt(var + BN_EPS) * g1_ref[...] + be1_ref[...]
    z = _leaky(z)
    tag = jnp.dot(z, w2_ref[...], preferred_element_type=jnp.float32) + b2_ref[...]

    for b in range(B):
        Lb = len_ref[b]
        first = (2 * Lb) // 3
        m = ((t_idx >= first) & (t_idx < Lb) & (b_idx == b)).astype(jnp.float32)
        denom = (Lb - first).astype(jnp.float32)
        o_ref[pl.ds(b, 1), :] = jnp.sum(tag * m, axis=0, keepdims=True) / denom


def head_stage(lstm_out, lens, w1p, b1p, g1p, be1p, w2p, b2p):
    # TODO(synk): single-block kernel (fine for small T*B); tiling it would need
    # a two-pass masked BN like the g/f stages.
    B = lstm_out.shape[1]
    tgp = w2p.shape[1]
    sm = pl.BlockSpec(memory_space=pltpu.MemorySpace.SMEM)
    vm = pl.BlockSpec(memory_space=pltpu.MemorySpace.VMEM)
    return pl.pallas_call(
        _head_kernel,
        in_specs=[sm] + [vm] * 7,
        out_specs=vm,
        out_shape=jax.ShapeDtypeStruct((B, tgp), jnp.float32),
        compiler_params=pltpu.CompilerParams(vmem_limit_bytes=VMEM_LIMIT),
    )(lens, lstm_out, w1p, b1p, g1p, be1p, w2p, b2p)


# ----------------------------------------------------------------------------
# Parameter initialization (torch-like uniform bounds), with lane padding
# ----------------------------------------------------------------------------
def _pad2(w, rows, cols):
    out = jnp.zeros((rows, cols), jnp.float32)
    return out.at[:w.shape[0], :w.shape[1]].set(w)


def _pad_gate_cols(w, h, hp):
    # [in, 4h] -> [in, 4hp], each gate block left-aligned in a 128-lane slot
    out = jnp.zeros((w.shape[0], 4 * hp), jnp.float32)
    for k in range(4):
        out = out.at[:, k * hp:k * hp + h].set(w[:, k * h:(k + 1) * h])
    return out


def init_params(key, input_size, joint_size, hidden_dim, target_size):
    g_size = 256
    f_size = 256
    J = input_size // joint_size
    combs = list(itertools.combinations(range(J), 2))
    H = hidden_dim
    Hp = _round_up(H, LANE)
    Tp = _round_up(target_size, LANE)

    keys = iter(jax.random.split(key, 64))

    def uni(shape, bound):
        return jax.random.uniform(next(keys), shape, jnp.float32, -bound, bound)

    def linear(in_f, out_f):
        bound = 1.0 / math.sqrt(in_f)
        return uni((in_f, out_f), bound), uni((out_f,), bound)

    p = {"joint_size": joint_size, "hidden_dim": H, "hidden_pad": Hp,
         "target_size": target_size, "target_pad": Tp,
         "idx_i": [c[0] for c in combs], "idx_j": [c[1] for c in combs]}

    p["g_fc1_w"], b = linear(2 * joint_size, g_size); p["g_fc1_b"] = b.reshape(1, -1)
    p["g_fc2_w"], b = linear(g_size, g_size);         p["g_fc2_b"] = b.reshape(1, -1)
    p["g_fc3_w"], b = linear(g_size, f_size);         p["g_fc3_b"] = b.reshape(1, -1)
    p["f_fc1_w"], b = linear(f_size, f_size);         p["f_fc1_b"] = b.reshape(1, -1)
    p["f_fc2_w"], b = linear(f_size, f_size);         p["f_fc2_b"] = b.reshape(1, -1)
    w3, b3 = linear(f_size, H)
    p["f_fc3_wp"] = _pad2(w3, f_size, Hp)
    p["f_fc3_bp"] = _pad2(b3.reshape(1, -1), 1, Hp)

    # BatchNorm affine params (fresh torch module: weight=1, bias=0)
    for name, width in (("bng1", g_size), ("bng2", g_size),
                        ("bnf1", f_size), ("bnf2", f_size)):
        p[name + "_g"] = jnp.ones((width,), jnp.float32)
        p[name + "_b"] = jnp.zeros((width,), jnp.float32)
    p["bnh1_gp"] = _pad2(jnp.ones((1, H), jnp.float32), 1, Hp)
    p["bnh1_bp"] = _pad2(jnp.zeros((1, H), jnp.float32), 1, Hp)

    # hidden1 / hidden2, padded to lane-dense widths (pad rows/cols are zero)
    w, b = linear(H, H)
    p["h1_wp"] = _pad2(w, Hp, Hp)
    p["h1_bp"] = _pad2(b.reshape(1, -1), 1, Hp)
    w, b = linear(H, target_size)
    p["h2_wp"] = _pad2(w, Hp, Tp)
    p["h2_bp"] = _pad2(b.reshape(1, -1), 1, Tp)

    # LSTM (depth=2), gate order i,f,g,o, stored transposed [in, 4H], each gate
    # padded to a full 128-lane block (clean vreg slices in the recurrence).
    Din0 = H + input_size
    bound = 1.0 / math.sqrt(H)
    wih0 = uni((Din0, 4 * H), bound)
    whh0 = uni((H, 4 * H), bound)
    b0 = (uni((4 * H,), bound) + uni((4 * H,), bound)).reshape(1, -1)
    wih1 = uni((H, 4 * H), bound)
    whh1 = uni((H, 4 * H), bound)
    b1 = (uni((4 * H,), bound) + uni((4 * H,), bound)).reshape(1, -1)

    wih0p = _pad_gate_cols(wih0, H, Hp)                 # [Din0, 4Hp]
    p["wih0_x_p"] = _pad2(wih0p[:H], Hp, 4 * Hp)        # rows for the x_f part
    p["wih0_d_p"] = wih0p[H:]                           # rows for the raw input
    p["b0_p"] = _pad_gate_cols(b0, H, Hp)
    p["whh0_p"] = _pad2(_pad_gate_cols(whh0, H, Hp), Hp, 4 * Hp)
    p["wih1_p"] = _pad2(_pad_gate_cols(wih1, H, Hp), Hp, 4 * Hp)
    p["whh1_p"] = _pad2(_pad_gate_cols(whh1, H, Hp), Hp, 4 * Hp)
    p["b1_p"] = _pad_gate_cols(b1, H, Hp)
    return p


# ----------------------------------------------------------------------------
# Full forward pass
# ----------------------------------------------------------------------------
def relational_lstm_forward(p, data, batch_len):
    B, T, input_size = data.shape
    js = p["joint_size"]
    J = input_size // js
    Hp = p["hidden_pad"]
    comb = len(p["idx_i"])

    # time-major from the start (cheap transpose of the small raw input only)
    data_tm = jnp.transpose(data, (1, 0, 2))            # [T, B, input]
    data_flat = data_tm.reshape(T * B, input_size)
    n_g = T * B * comb
    n_f = T * B

    # relational pairing (tiny XLA gather/concat on raw joints)
    # TODO(synk): could use the proj_i + proj_j decomposition to halve g_fc1
    # FLOPs and avoid materializing the pair tensor.
    x4 = data_tm.reshape(T, B, J, js)
    idx_i = jnp.array(p["idx_i"], jnp.int32)
    idx_j = jnp.array(p["idx_j"], jnp.int32)
    pairs = jnp.concatenate([x4[:, :, idx_i, :], x4[:, :, idx_j, :]], axis=3)
    pairs = pairs.reshape(n_g, 2 * js)

    # ---- g network (BN folded into the consumer stage; stats from partials)
    y1, st1 = fused_linear_stage(pairs, p["g_fc1_w"], p["g_fc1_b"])
    sc1, sh1 = _bn_scale_shift(st1, n_g, p["bng1_g"], p["bng1_b"])
    y2, st2 = fused_linear_stage(y1, p["g_fc2_w"], p["g_fc2_b"], sc1, sh1)
    sc2, sh2 = _bn_scale_shift(st2, n_g, p["bng2_g"], p["bng2_b"])
    x_g = g3_sum_stage(y2, sc2, sh2, p["g_fc3_w"], p["g_fc3_b"], n_f, comb)

    # ---- f network
    z1, stf1 = fused_linear_stage(x_g, p["f_fc1_w"], p["f_fc1_b"])
    scf1, shf1 = _bn_scale_shift(stf1, n_f, p["bnf1_g"], p["bnf1_b"])
    z2, stf2 = fused_linear_stage(z1, p["f_fc2_w"], p["f_fc2_b"], scf1, shf1)
    scf2, shf2 = _bn_scale_shift(stf2, n_f, p["bnf2_g"], p["bnf2_b"])

    # ---- f_fc3 fused with the LSTM layer-0 input projection (hoisted matmul)
    xp = f3_proj_stage(z2, scf2, shf2, p["f_fc3_wp"], p["f_fc3_bp"],
                       data_flat, p["wih0_x_p"], p["wih0_d_p"], p["b0_p"])
    xp_tm = xp.reshape(T, B, 4 * Hp)

    # ---- 2-layer LSTM (single kernel, recurrent matmuls only on serial path)
    lstm_out = lstm2_fused(xp_tm, p["whh0_p"], p["wih1_p"], p["whh1_p"], p["b1_p"])

    # ---- hidden1 + masked BN + LeakyReLU + hidden2 + ragged tail mean
    lens = jnp.asarray(batch_len, jnp.int32)
    out_p = head_stage(lstm_out, lens, p["h1_wp"], p["h1_bp"],
                       p["bnh1_gp"], p["bnh1_bp"], p["h2_wp"], p["h2_bp"])
    return out_p[:, :p["target_size"]]


# ----------------------------------------------------------------------------
if __name__ == "__main__":
    joint_size = 4
    joint_count = 5
    input_size = joint_size * joint_count     # 20
    hidden_dim = 32
    target_size = 6
    B, T = 2, 8
    batch_len = [8, 6]                        # descending (enforce_sorted)

    key = jax.random.PRNGKey(0)
    k_param, k_data = jax.random.split(key)
    params = init_params(k_param, input_size, joint_size, hidden_dim, target_size)
    data = jax.random.normal(k_data, (B, T, input_size), dtype=jnp.float32)

    out = relational_lstm_forward(params, data, batch_len)
    out = jax.block_until_ready(out)
    assert out.shape == (B, target_size), out.shape
    assert bool(jnp.all(jnp.isfinite(out)))
    print("KERNEL_OK")
</pallas_src>

<mosaic_0001>
module attributes {stable_mosaic.version = 11 : i64} {
  func.func @kernel(%arg0: i32, %arg1: memref<160x8xf32, #tpu.memory_space<vmem>>, %arg2: memref<8x256xf32, #tpu.memory_space<vmem>>, %arg3: memref<1x256xf32, #tpu.memory_space<vmem>>, %arg4: memref<160x256xf32, #tpu.memory_space<vmem>>, %arg5: memref<1x2x256xf32, #tpu.memory_space<vmem>>) attributes {dimension_semantics = [#tpu.dimension_semantics<parallel>], iteration_bounds = array<i64: 1>, scalar_prefetch = 0 : i64, scratch_operands = 0 : i64, tpu.core_type = #tpu.core_type<tc>, window_params = [{transform_indices = @transform_0, window_bounds = array<i64: 160, 8>}, {pipeline_mode = #tpu.pipeline_mode<synchronous>, transform_indices = @transform_1, window_bounds = array<i64: 8, 256>}, {pipeline_mode = #tpu.pipeline_mode<synchronous>, transform_indices = @transform_2, window_bounds = array<i64: 1, 256>}, {transform_indices = @transform_3, window_bounds = array<i64: 160, 256>}, {transform_indices = @transform_4, window_bounds = array<i64: 1, 2, 256>}]} {
    %c0 = arith.constant 0 : index
    %c0_0 = arith.constant 0 : index
    %0 = vector.load %arg1[%c0, %c0_0] : memref<160x8xf32, #tpu.memory_space<vmem>>, vector<160x8xf32>
    %c0_1 = arith.constant 0 : index
    %c0_2 = arith.constant 0 : index
    %1 = vector.load %arg2[%c0_1, %c0_2] : memref<8x256xf32, #tpu.memory_space<vmem>>, vector<8x256xf32>
    %cst = arith.constant dense<0.000000e+00> : vector<160x256xf32>
    %2 = tpu.matmul %0, %1, %cst {dimension_numbers = #tpu.dot_dimension_numbers<[1], [0], [0], [1], [0, 0, 1, 1], [], []>} : vector<160x8xf32>, vector<8x256xf32>, vector<160x256xf32> -> vector<160x256xf32>
    %c0_3 = arith.constant 0 : index
    %c0_4 = arith.constant 0 : index
    %3 = vector.load %arg3[%c0_3, %c0_4] : memref<1x256xf32, #tpu.memory_space<vmem>>, vector<1x256xf32>
    %4 = vector.broadcast %3 : vector<1x256xf32> to vector<160x256xf32>
    %5 = arith.addf %2, %4 : vector<160x256xf32>
    %cst_5 = arith.constant 0.000000e+00 : f32
    %6 = vector.broadcast %cst_5 : f32 to vector<160x256xf32>
    %7 = arith.cmpf ogt, %5, %6 : vector<160x256xf32>
    %cst_6 = arith.constant 0.00999999977 : f32
    %8 = vector.broadcast %cst_6 : f32 to vector<160x256xf32>
    %9 = arith.mulf %8, %5 : vector<160x256xf32>
    %10 = arith.select %7, %5, %9 : vector<160x256xi1>, vector<160x256xf32>
    %c0_7 = arith.constant 0 : index
    %c0_8 = arith.constant 0 : index
    %11 = vector.load %arg4[%c0_7, %c0_8] : memref<160x256xf32, #tpu.memory_space<vmem>>, vector<160x256xf32>
    tpu.vector_store %arg4[%c0_7, %c0_8], %10 {strides = array<i32>} : memref<160x256xf32, #tpu.memory_space<vmem>>, vector<160x256xf32>,
    %12 = tpu.iota {dimensions = array<i32: 0>} : vector<160x1xi32>
    %c160_i32 = arith.constant 160 : i32
    %13 = arith.muli %arg0, %c160_i32 : i32
    %14 = vector.broadcast %13 : i32 to vector<160x1xi32>
    %15 = arith.addi %12, %14 : vector<160x1xi32>
    %c160_i32_9 = arith.constant 160 : i32
    %16 = vector.broadcast %c160_i32_9 : i32 to vector<160x1xi32>
    %17 = arith.cmpi slt, %15, %16 : vector<160x1xi32>
    %18 = arith.extui %17 : vector<160x1xi1> to vector<160x1xi32>
    %19 = arith.sitofp %18 : vector<160x1xi32> to vector<160x1xf32>
    %20 = vector.broadcast %19 : vector<160x1xf32> to vector<160x256xf32>
    %21 = arith.mulf %10, %20 : vector<160x256xf32>
    %cst_10 = arith.constant dense<0.000000e+00> : vector<256xf32>
    %22 = vector.multi_reduction <add>, %21, %cst_10 [0] : vector<160x256xf32> to vector<256xf32>
    %23 = vector.shape_cast %22 : vector<256xf32> to vector<1x256xf32>
    %24 = arith.mulf %21, %10 : vector<160x256xf32>
    %cst_11 = arith.constant dense<0.000000e+00> : vector<256xf32>
    %25 = vector.multi_reduction <add>, %24, %cst_11 [0] : vector<160x256xf32> to vector<256xf32>
    %26 = vector.shape_cast %25 : vector<256xf32> to vector<1x256xf32>
    %27 = tpu.concatenate %23, %26 in 0 : vector<1x256xf32>, vector<1x256xf32> -> vector<2x256xf32>
    %28 = vector.shape_cast %27 : vector<2x256xf32> to vector<1x2x256xf32>
    %c0_12 = arith.constant 0 : index
    %c0_13 = arith.constant 0 : index
    %c0_14 = arith.constant 0 : index
    %29 = vector.load %arg5[%c0_12, %c0_13, %c0_14] : memref<1x2x256xf32, #tpu.memory_space<vmem>>, vector<1x2x256xf32>
    tpu.vector_store %arg5[%c0_12, %c0_13, %c0_14], %28 {strides = array<i32>} : memref<1x2x256xf32, #tpu.memory_space<vmem>>, vector<1x2x256xf32>,
    return
  }
  func.func @transform_0(%arg0: i32) -> (i32, i32) {
    %c0_i32 = arith.constant 0 : i32
    %c0_i32_0 = arith.constant 0 : i32
    return %arg0, %c0_i32 : i32, i32
  }
  func.func @transform_1(%arg0: i32) -> (i32, i32) {
    %c0_i32 = arith.constant 0 : i32
    %c0_i32_0 = arith.constant 0 : i32
    %c0_i32_1 = arith.constant 0 : i32
    return %c0_i32, %c0_i32_0 : i32, i32
  }
  func.func @transform_2(%arg0: i32) -> (i32, i32) {
    %c0_i32 = arith.constant 0 : i32
    %c0_i32_0 = arith.constant 0 : i32
    %c0_i32_1 = arith.constant 0 : i32
    return %c0_i32, %c0_i32_0 : i32, i32
  }
  func.func @transform_3(%arg0: i32) -> (i32, i32) {
    %c0_i32 = arith.constant 0 : i32
    %c0_i32_0 = arith.constant 0 : i32
    return %arg0, %c0_i32 : i32, i32
  }
  func.func @transform_4(%arg0: i32) -> (i32, i32, i32) {
    %c0_i32 = arith.constant 0 : i32
    %c0_i32_0 = arith.constant 0 : i32
    %c0_i32_1 = arith.constant 0 : i32
    return %arg0, %c0_i32, %c0_i32_0 : i32, i32, i32
  }
}

</mosaic_0001>

<llo_original>
// kernel: tpu_custom_call.1
$region0: #{tpu_custom_call.1}
  #allocation0 [shape = 'u32[]', space=smem, size = 0x4, offset = 0x4, fixed_abs, tag = 'smem constant byte address 0x4 - core index']
  #allocation1 [shape = 'u32[144,128]{1,0:T(1,128)}', space=vmem, size = 0x12000, scoped, tag = 'internal scratch']
  %s0 = inlined_call_operand.vmem [shape: f32[160,8], index: 0, kind: input, shape index: {}]
  %s1 = inlined_call_operand.vmem [shape: f32[8,256], index: 1, kind: input, shape index: {}]
  %s2 = inlined_call_operand.vmem [shape: f32[1,256], index: 2, kind: input, shape index: {}]
  %s3 = inlined_call_operand.hbm [shape: f32[160,256], index: 3, kind: output, shape index: {0}]
  %s4 = inlined_call_operand.hbm [shape: f32[1,2,256], index: 4, kind: output, shape index: {1}]
  %5 = xla_tuple %s3, %s4
  %s6 = sld [smem:[#allocation0]]
  $region30: #{tpu_custom_call.1} parent=0
    _
  %s8 = ssub.s32 1, %s6
  %s9 = scalar_select 0, %s8, %s6
  $region1: #{tpu_custom_call.1} parent=0
    #allocation2 [shape = 'u8[163840]{0}', space=vmem, size = 0x28000, scoped, tag = 'output window, operand 0, single buffered']
    #allocation3 [shape = 's32[1]{0}', space=sflag, size = 0x4, scoped, tag = 'scoped memory for tpu_custom_call.1']
    #allocation4 [shape = 'u8[2048]{0}', space=vmem, size = 0x800, scoped, tag = 'output window, operand 1, single buffered']
    #allocation5 [shape = 's32[1]{0}', space=sflag, size = 0x4, scoped, tag = 'scoped memory for tpu_custom_call.1']
    %10 = vsyncpa [#allocation3], 0
    %11 = vsyncpa [#allocation5], 0
    // Predicated region
    $region2: #{tpu_custom_call.1} parent=1 // pred_check
      _
    $region3: #{tpu_custom_call.1} parent=1 // pred_check_branch
      %13 = sbr.rel (0) target = $region5
    $region4: #{tpu_custom_call.1} parent=1 // pred_region
      _
    $region5: #{tpu_custom_call.1} parent=1 // pred_fallthru
      _
    // Predicated region
    $region6: #{tpu_custom_call.1} parent=1 // pred_check
      _
    $region7: #{tpu_custom_call.1} parent=1 // pred_check_branch
      %15 = sbr.rel (0) target = $region9
    $region8: #{tpu_custom_call.1} parent=1 // pred_region
      _
    $region9: #{tpu_custom_call.1} parent=1 // pred_fallthru
      _
    // Predicated region
    $region10: #{tpu_custom_call.1} parent=1 // pred_check
      _
    $region11: #{tpu_custom_call.1} parent=1 // pred_check_branch
      %17 = sbr.rel (0) target = $region13
    $region12: #{tpu_custom_call.1} parent=1 // pred_region
      _
    $region13: #{tpu_custom_call.1} parent=1 // pred_fallthru
      _
    %v18 = vld [vmem:[%s0] sm:$0xff]
    %v19 = vld [vmem:[%s0 + $0x8] sm:$0xff]
    %v20 = vld [vmem:[%s0 + $0x10] sm:$0xff]
    %v21 = vld [vmem:[%s0 + $0x18] sm:$0xff]
    %v22 = vld [vmem:[%s0 + $0x20] sm:$0xff]
    %v23 = vld [vmem:[%s0 + $0x28] sm:$0xff]
    %v24 = vld [vmem:[%s0 + $0x30] sm:$0xff]
    %v25 = vld [vmem:[%s0 + $0x38] sm:$0xff]
    %v26 = vld [vmem:[%s0 + $0x40] sm:$0xff]
    %v27 = vld [vmem:[%s0 + $0x48] sm:$0xff]
    %v28 = vld [vmem:[%s0 + $0x50] sm:$0xff]
    %v29 = vld [vmem:[%s0 + $0x58] sm:$0xff]
    %v30 = vld [vmem:[%s0 + $0x60] sm:$0xff]
    %v31 = vld [vmem:[%s0 + $0x68] sm:$0xff]
    %v32 = vld [vmem:[%s0 + $0x70] sm:$0xff]
    %v33 = vld [vmem:[%s0 + $0x78] sm:$0xff]
    %v34 = vld [vmem:[%s0 + $0x80] sm:$0xff]
    %v35 = vld [vmem:[%s0 + $0x88] sm:$0xff]
    %v36 = vld [vmem:[%s0 + $0x90] sm:$0xff]
    %v37 = vld [vmem:[%s0 + $0x98] sm:$0xff]
    %v38 = vld [vmem:[%s1] sm:$0xff]
    %v39 = vld [vmem:[%s1 + $0x8] sm:$0xff]
    %v40 = vld [vmem:[%s2] sm:$0x3]
    %v42 = vlaneseq
    %v43 = vshrl.u32 %v42, 7
    %v44 = vsub.s32 0, %v43
    %v45 = vrot.slane %v40, %v44
    %v46 = vlaneseq
    %v47 = vshrl.u32 %v46, 7
    %v48 = vsub.s32 1, %v47
    %v49 = vrot.slane %v40, %v48
    %vm52 = vcmask 64512
    %v54 = vsel %vm52, %v18, 0
    %v57 = vsel %vm52, %v19, 0
    %v60 = vsel %vm52, %v20, 0
    %v63 = vsel %vm52, %v21, 0
    %v66 = vsel %vm52, %v22, 0
    %v69 = vsel %vm52, %v23, 0
    %v72 = vsel %vm52, %v24, 0
    %v75 = vsel %vm52, %v25, 0
    %v78 = vsel %vm52, %v26, 0
    %v81 = vsel %vm52, %v27, 0
    %v84 = vsel %vm52, %v28, 0
    %v87 = vsel %vm52, %v29, 0
    %v90 = vsel %vm52, %v30, 0
    %v93 = vsel %vm52, %v31, 0
    %v96 = vsel %vm52, %v32, 0
    %v99 = vsel %vm52, %v33, 0
    %v102 = vsel %vm52, %v34, 0
    %v105 = vsel %vm52, %v35, 0
    %v108 = vsel %vm52, %v36, 0
    %v111 = vsel %vm52, %v37, 0
    %113 = vmatprep.subr.mxu0 %v39
    %114 = vmatpush1.msra.mxu0 %v38
    %115 = vmatprep.subr.mxu0 0.0
    %116 = vmatpush1.msra.mxu0 0.0
    %117 = vmatprep.subr.mxu0 0.0
    %118 = vmatpush1.msra.mxu0 0.0
    %119 = vmatprep.subr.mxu0 0.0
    %120 = vmatpush1.msra.mxu0 0.0
    %121 = vmatprep.subr.mxu0 0.0
    %122 = vmatpush1.msra.mxu0 0.0
    %123 = vmatprep.subr.mxu0 0.0
    %124 = vmatpush1.msra.mxu0 0.0
    %125 = vmatprep.subr.mxu0 0.0
    %126 = vmatpush1.msra.mxu0 0.0
    %127 = vmatprep.subr.mxu0 0.0
    %128 = vmatpush1.msra.mxu0 0.0
    %129 = vmatprep.subr.mxu0 0.0
    %130 = vmatpush1.msra.mxu0 0.0
    %131 = vmatprep.subr.mxu0 0.0
    %132 = vmatpush1.msra.mxu0 0.0
    %133 = vmatprep.subr.mxu0 0.0
    %134 = vmatpush1.msra.mxu0 0.0
    %135 = vmatprep.subr.mxu0 0.0
    %136 = vmatpush1.msra.mxu0 0.0
    %137 = vmatprep.subr.mxu0 0.0
    %138 = vmatpush1.msra.mxu0 0.0
    %139 = vmatprep.subr.mxu0 0.0
    %140 = vmatpush1.msra.mxu0 0.0
    %141 = vmatprep.subr.mxu0 0.0
    %142 = vmatpush1.msra.mxu0 0.0
    %143 = vmatprep.subr.mxu0 0.0
    %144 = vmatpush1.msra.mxu0 0.0
    %145 = vmatprep.subr.mxu0 0.0
    %146 = vmatpush1.msra.mxu0 0.0
    %147 = vmatprep.subr.mxu0 0.0
    %148 = vmatpush1.msra.mxu0 0.0
    %149 = vmatprep.subr.mxu0 0.0
    %150 = vmatpush1.msra.mxu0 0.0
    %151 = vmatprep.subr.mxu0 0.0
    %152 = vmatpush1.msra.mxu0 0.0
    %153 = vmatprep.subr.mxu0 0.0
    %154 = vmatpush1.msra.mxu0 0.0
    %155 = vmatprep.subr.mxu0 0.0
    %156 = vmatpush1.msra.mxu0 0.0
    %157 = vmatprep.subr.mxu0 0.0
    %158 = vmatpush1.msra.mxu0 0.0
    %159 = vmatprep.subr.mxu0 0.0
    %160 = vmatpush1.msra.mxu0 0.0
    %161 = vmatprep.subr.mxu0 0.0
    %162 = vmatpush1.msra.mxu0 0.0
    %163 = vmatprep.subr.mxu0 0.0
    %164 = vmatpush1.msra.mxu0 0.0
    %165 = vmatprep.subr.mxu0 0.0
    %166 = vmatpush1.msra.mxu0 0.0
    %167 = vmatprep.subr.mxu0 0.0
    %168 = vmatpush1.msra.mxu0 0.0
    %169 = vmatprep.subr.mxu0 0.0
    %170 = vmatpush1.msra.mxu0 0.0
    %171 = vmatprep.subr.mxu0 0.0
    %172 = vmatpush1.msra.mxu0 0.0
    %173 = vmatprep.subr.mxu0 0.0
    %174 = vmatpush1.msra.mxu0 0.0
    %175 = vmatprep.subr.mxu0 0.0
    %176 = vmatpush1.msra.mxu0 0.0
    %177 = vmatprep.mubr.f32.mxu0 0.0
    %178 = vmatmul.mubr.f32.gmra.mrb[0].mxu0 %v54
    %v179 = vpop.f32.mrb[0].mxu0
    %v180 = vadd.f32 %v45, %v179
    %v181 = vpop.f32.mrb[0].mxu0
    %v182 = vadd.f32 %v49, %v181
    %183 = vmatprep.mubr.f32.mxu0 0.0
    %184 = vmatmul.mubr.f32.gmra.mrb[0].mxu0 %v57
    %v185 = vpop.f32.mrb[0].mxu0
    %v186 = vadd.f32 %v45, %v185
    %v187 = vpop.f32.mrb[0].mxu0
    %v188 = vadd.f32 %v49, %v187
    %189 = vmatprep.mubr.f32.mxu0 0.0
    %190 = vmatmul.mubr.f32.gmra.mrb[0].mxu0 %v60
    %v191 = vpop.f32.mrb[0].mxu0
    %v192 = vadd.f32 %v45, %v191
    %v193 = vpop.f32.mrb[0].mxu0
    %v194 = vadd.f32 %v49, %v193
    %195 = vmatprep.mubr.f32.mxu0 0.0
    %196 = vmatmul.mubr.f32.gmra.mrb[0].mxu0 %v63
    %v197 = vpop.f32.mrb[0].mxu0
    %v198 = vadd.f32 %v45, %v197
    %v199 = vpop.f32.mrb[0].mxu0
    %v200 = vadd.f32 %v49, %v199
    %201 = vmatprep.mubr.f32.mxu0 0.0
    %202 = vmatmul.mubr.f32.gmra.mrb[0].mxu0 %v66
    %v203 = vpop.f32.mrb[0].mxu0
    %v204 = vadd.f32 %v45, %v203
    %v205 = vpop.f32.mrb[0].mxu0
    %v206 = vadd.f32 %v49, %v205
    %207 = vmatprep.mubr.f32.mxu0 0.0
    %208 = vmatmul.mubr.f32.gmra.mrb[0].mxu0 %v69
    %v209 = vpop.f32.mrb[0].mxu0
    %v210 = vadd.f32 %v45, %v209
    %v211 = vpop.f32.mrb[0].mxu0
    %v212 = vadd.f32 %v49, %v211
    %213 = vmatprep.mubr.f32.mxu0 0.0
    %214 = vmatmul.mubr.f32.gmra.mrb[0].mxu0 %v72
    %v215 = vpop.f32.mrb[0].mxu0
    %v216 = vadd.f32 %v45, %v215
    %v217 = vpop.f32.mrb[0].mxu0
    %v218 = vadd.f32 %v49, %v217
    %219 = vmatprep.mubr.f32.mxu0 0.0
    %220 = vmatmul.mubr.f32.gmra.mrb[0].mxu0 %v75
    %v221 = vpop.f32.mrb[0].mxu0
    %v222 = vadd.f32 %v45, %v221
    %v223 = vpop.f32.mrb[0].mxu0
    %v224 = vadd.f32 %v49, %v223
    %225 = vmatprep.mubr.f32.mxu0 0.0
    %226 = vmatmul.mubr.f32.gmra.mrb[0].mxu0 %v78
    %v227 = vpop.f32.mrb[0].mxu0
    %v228 = vadd.f32 %v45, %v227
    %v229 = vpop.f32.mrb[0].mxu0
    %v230 = vadd.f32 %v49, %v229
    %231 = vmatprep.mubr.f32.mxu0 0.0
    %232 = vmatmul.mubr.f32.gmra.mrb[0].mxu0 %v81
    %v233 = vpop.f32.mrb[0].mxu0
    %v234 = vadd.f32 %v45, %v233
    %v235 = vpop.f32.mrb[0].mxu0
    %v236 = vadd.f32 %v49, %v235
    %237 = vmatprep.mubr.f32.mxu0 0.0
    %238 = vmatmul.mubr.f32.gmra.mrb[0].mxu0 %v84
    %v239 = vpop.f32.mrb[0].mxu0
    %v240 = vadd.f32 %v45, %v239
    %v241 = vpop.f32.mrb[0].mxu0
    %v242 = vadd.f32 %v49, %v241
    %243 = vmatprep.mubr.f32.mxu0 0.0
    %244 = vmatmul.mubr.f32.gmra.mrb[0].mxu0 %v87
    %v245 = vpop.f32.mrb[0].mxu0
    %v246 = vadd.f32 %v45, %v245
    %v247 = vpop.f32.mrb[0].mxu0
    %v248 = vadd.f32 %v49, %v247
    %249 = vmatprep.mubr.f32.mxu0 0.0
    %250 = vmatmul.mubr.f32.gmra.mrb[0].mxu0 %v90
    %v251 = vpop.f32.mrb[0].mxu0
    %v252 = vadd.f32 %v45, %v251
    %v253 = vpop.f32.mrb[0].mxu0
    %v254 = vadd.f32 %v49, %v253
    %255 = vmatprep.mubr.f32.mxu0 0.0
    %256 = vmatmul.mubr.f32.gmra.mrb[0].mxu0 %v93
    %v257 = vpop.f32.mrb[0].mxu0
    %v258 = vadd.f32 %v45, %v257
    %v259 = vpop.f32.mrb[0].mxu0
    %v260 = vadd.f32 %v49, %v259
    %261 = vmatprep.mubr.f32.mxu0 0.0
    %262 = vmatmul.mubr.f32.gmra.mrb[0].mxu0 %v96
    %v263 = vpop.f32.mrb[0].mxu0
    %v264 = vadd.f32 %v45, %v263
    %v265 = vpop.f32.mrb[0].mxu0
    %v266 = vadd.f32 %v49, %v265
    %267 = vmatprep.mubr.f32.mxu0 0.0
    %268 = vmatmul.mubr.f32.gmra.mrb[0].mxu0 %v99
    %v269 = vpop.f32.mrb[0].mxu0
    %v270 = vadd.f32 %v45, %v269
    %v271 = vpop.f32.mrb[0].mxu0
    %v272 = vadd.f32 %v49, %v271
    %273 = vmatprep.mubr.f32.mxu0 0.0
    %274 = vmatmul.mubr.f32.gmra.mrb[0].mxu0 %v102
    %v275 = vpop.f32.mrb[0].mxu0
    %v276 = vadd.f32 %v45, %v275
    %v277 = vpop.f32.mrb[0].mxu0
    %v278 = vadd.f32 %v49, %v277
    %279 = vmatprep.mubr.f32.mxu0 0.0
    %280 = vmatmul.mubr.f32.gmra.mrb[0].mxu0 %v105
    %v281 = vpop.f32.mrb[0].mxu0
    %v282 = vadd.f32 %v45, %v281
    %v283 = vpop.f32.mrb[0].mxu0
    %v284 = vadd.f32 %v49, %v283
    %285 = vmatprep.mubr.f32.mxu0 0.0
    %286 = vmatmul.mubr.f32.gmra.mrb[0].mxu0 %v108
    %v287 = vpop.f32.mrb[0].mxu0
    %v288 = vadd.f32 %v45, %v287
    %v289 = vpop.f32.mrb[0].mxu0
    %v290 = vadd.f32 %v49, %v289
    %291 = vmatprep.mubr.f32.mxu0 0.0
    %292 = vmatmul.mubr.f32.gmra.mrb[0].mxu0 %v111
    %v293 = vpop.f32.mrb[0].mxu0
    %v294 = vadd.f32 %v45, %v293
    %v295 = vpop.f32.mrb[0].mxu0
    %v296 = vadd.f32 %v49, %v295
    %297 = vdwg.mxu0
    %vm298 = vcmp.gt.f32.partialorder %v180, 0.0
    %vm299 = vcmp.gt.f32.partialorder %v182, 0.0
    %vm300 = vcmp.gt.f32.partialorder %v186, 0.0
    %vm301 = vcmp.gt.f32.partialorder %v188, 0.0
    %vm302 = vcmp.gt.f32.partialorder %v192, 0.0
    %vm303 = vcmp.gt.f32.partialorder %v194, 0.0
    %vm304 = vcmp.gt.f32.partialorder %v198, 0.0
    %vm305 = vcmp.gt.f32.partialorder %v200, 0.0
    %vm306 = vcmp.gt.f32.partialorder %v204, 0.0
    %vm307 = vcmp.gt.f32.partialorder %v206, 0.0
    %vm308 = vcmp.gt.f32.partialorder %v210, 0.0
    %vm309 = vcmp.gt.f32.partialorder %v212, 0.0
    %vm310 = vcmp.gt.f32.partialorder %v216, 0.0
    %vm311 = vcmp.gt.f32.partialorder %v218, 0.0
    %vm312 = vcmp.gt.f32.partialorder %v222, 0.0
    %vm313 = vcmp.gt.f32.partialorder %v224, 0.0
    %vm314 = vcmp.gt.f32.partialorder %v228, 0.0
    %vm315 = vcmp.gt.f32.partialorder %v230, 0.0
    %vm316 = vcmp.gt.f32.partialorder %v234, 0.0
    %vm317 = vcmp.gt.f32.partialorder %v236, 0.0
    %vm318 = vcmp.gt.f32.partialorder %v240, 0.0
    %vm319 = vcmp.gt.f32.partialorder %v242, 0.0
    %vm320 = vcmp.gt.f32.partialorder %v246, 0.0
    %vm321 = vcmp.gt.f32.partialorder %v248, 0.0
    %vm322 = vcmp.gt.f32.partialorder %v252, 0.0
    %vm323 = vcmp.gt.f32.partialorder %v254, 0.0
    %vm324 = vcmp.gt.f32.partialorder %v258, 0.0
    %vm325 = vcmp.gt.f32.partialorder %v260, 0.0
    %vm326 = vcmp.gt.f32.partialorder %v264, 0.0
    %vm327 = vcmp.gt.f32.partialorder %v266, 0.0
    %vm328 = vcmp.gt.f32.partialorder %v270, 0.0
    %vm329 = vcmp.gt.f32.partialorder %v272, 0.0
    %vm330 = vcmp.gt.f32.partialorder %v276, 0.0
    %vm331 = vcmp.gt.f32.partialorder %v278, 0.0
    %vm332 = vcmp.gt.f32.partialorder %v282, 0.0
    %vm333 = vcmp.gt.f32.partialorder %v284, 0.0
    %vm334 = vcmp.gt.f32.partialorder %v288, 0.0
    %vm335 = vcmp.gt.f32.partialorder %v290, 0.0
    %vm336 = vcmp.gt.f32.partialorder %v294, 0.0
    %vm337 = vcmp.gt.f32.partialorder %v296, 0.0
    %v338 = vmul.f32 %v180, 0.01
    %v339 = vmul.f32 %v182, 0.01
    %v340 = vmul.f32 %v186, 0.01
    %v341 = vmul.f32 %v188, 0.01
    %v342 = vmul.f32 %v192, 0.01
    %v343 = vmul.f32 %v194, 0.01
    %v344 = vmul.f32 %v198, 0.01
    %v345 = vmul.f32 %v200, 0.01
    %v346 = vmul.f32 %v204, 0.01
    %v347 = vmul.f32 %v206, 0.01
    %v348 = vmul.f32 %v210, 0.01
    %v349 = vmul.f32 %v212, 0.01
    %v350 = vmul.f32 %v216, 0.01
    %v351 = vmul.f32 %v218, 0.01
    %v352 = vmul.f32 %v222, 0.01
    %v353 = vmul.f32 %v224, 0.01
    %v354 = vmul.f32 %v228, 0.01
    %v355 = vmul.f32 %v230, 0.01
    %v356 = vmul.f32 %v234, 0.01
    %v357 = vmul.f32 %v236, 0.01
    %v358 = vmul.f32 %v240, 0.01
    %v359 = vmul.f32 %v242, 0.01
    %v360 = vmul.f32 %v246, 0.01
    %v361 = vmul.f32 %v248, 0.01
    %v362 = vmul.f32 %v252, 0.01
    %v363 = vmul.f32 %v254, 0.01
    %v364 = vmul.f32 %v258, 0.01
    %v365 = vmul.f32 %v260, 0.01
    %v366 = vmul.f32 %v264, 0.01
    %v367 = vmul.f32 %v266, 0.01
    %v368 = vmul.f32 %v270, 0.01
    %v369 = vmul.f32 %v272, 0.01
    %v370 = vmul.f32 %v276, 0.01
    %v371 = vmul.f32 %v278, 0.01
    %v372 = vmul.f32 %v282, 0.01
    %v373 = vmul.f32 %v284, 0.01
    %v374 = vmul.f32 %v288, 0.01
    %v375 = vmul.f32 %v290, 0.01
    %v376 = vmul.f32 %v294, 0.01
    %v377 = vmul.f32 %v296, 0.01
    %v378 = vsel %vm298, %v180, %v338
    %v379 = vsel %vm299, %v182, %v339
    %v380 = vsel %vm300, %v186, %v340
    %v381 = vsel %vm301, %v188, %v341
    %v382 = vsel %vm302, %v192, %v342
    %v383 = vsel %vm303, %v194, %v343
    %v384 = vsel %vm304, %v198, %v344
    %v385 = vsel %vm305, %v200, %v345
    %v386 = vsel %vm306, %v204, %v346
    %v387 = vsel %vm307, %v206, %v347
    %v388 = vsel %vm308, %v210, %v348
    %v389 = vsel %vm309, %v212, %v349
    %v390 = vsel %vm310, %v216, %v350
    %v391 = vsel %vm311, %v218, %v351
    %v392 = vsel %vm312, %v222, %v352
    %v393 = vsel %vm313, %v224, %v353
    %v394 = vsel %vm314, %v228, %v354
    %v395 = vsel %vm315, %v230, %v355
    %v396 = vsel %vm316, %v234, %v356
    %v397 = vsel %vm317, %v236, %v357
    %v398 = vsel %vm318, %v240, %v358
    %v399 = vsel %vm319, %v242, %v359
    %v400 = vsel %vm320, %v246, %v360
    %v401 = vsel %vm321, %v248, %v361
    %v402 = vsel %vm322, %v252, %v362
    %v403 = vsel %vm323, %v254, %v363
    %v404 = vsel %vm324, %v258, %v364
    %v405 = vsel %vm325, %v260, %v365
    %v406 = vsel %vm326, %v264, %v366
    %v407 = vsel %vm327, %v266, %v367
    %v408 = vsel %vm328, %v270, %v368
    %v409 = vsel %vm329, %v272, %v369
    %v410 = vsel %vm330, %v276, %v370
    %v411 = vsel %vm331, %v278, %v371
    %v412 = vsel %vm332, %v282, %v372
    %v413 = vsel %vm333, %v284, %v373
    %v414 = vsel %vm334, %v288, %v374
    %v415 = vsel %vm335, %v290, %v375
    %v416 = vsel %vm336, %v294, %v376
    %v417 = vsel %vm337, %v296, %v377
    %418 = vst [vmem:[#allocation2] sm:$0xff] %v378
    %419 = vst [vmem:[#allocation2 + $0x8] sm:$0xff] %v379
    %420 = vst [vmem:[#allocation2 + $0x10] sm:$0xff] %v380
    %421 = vst [vmem:[#allocation2 + $0x18] sm:$0xff] %v381
    %422 = vst [vmem:[#allocation2 + $0x20] sm:$0xff] %v382
    %423 = vst [vmem:[#allocation2 + $0x28] sm:$0xff] %v383
    %424 = vst [vmem:[#allocation2 + $0x30] sm:$0xff] %v384
    %425 = vst [vmem:[#allocation2 + $0x38] sm:$0xff] %v385
    %426 = vst [vmem:[#allocation2 + $0x40] sm:$0xff] %v386
    %427 = vst [vmem:[#allocation2 + $0x48] sm:$0xff] %v387
    %428 = vst [vmem:[#allocation2 + $0x50] sm:$0xff] %v388
    %429 = vst [vmem:[#allocation2 + $0x58] sm:$0xff] %v389
    %430 = vst [vmem:[#allocation2 + $0x60] sm:$0xff] %v390
    %431 = vst [vmem:[#allocation2 + $0x68] sm:$0xff] %v391
    %432 = vst [vmem:[#allocation2 + $0x70] sm:$0xff] %v392
    %433 = vst [vmem:[#allocation2 + $0x78] sm:$0xff] %v393
    %434 = vst [vmem:[#allocation2 + $0x80] sm:$0xff] %v394
    %435 = vst [vmem:[#allocation2 + $0x88] sm:$0xff] %v395
    %436 = vst [vmem:[#allocation2 + $0x90] sm:$0xff] %v396
    %437 = vst [vmem:[#allocation2 + $0x98] sm:$0xff] %v397
    %438 = vst [vmem:[#allocation2 + $0xa0] sm:$0xff] %v398
    %439 = vst [vmem:[#allocation2 + $0xa8] sm:$0xff] %v399
    %440 = vst [vmem:[#allocation2 + $0xb0] sm:$0xff] %v400
    %441 = vst [vmem:[#allocation2 + $0xb8] sm:$0xff] %v401
    %442 = vst [vmem:[#allocation2 + $0xc0] sm:$0xff] %v402
    %443 = vst [vmem:[#allocation2 + $0xc8] sm:$0xff] %v403
    %444 = vst [vmem:[#allocation2 + $0xd0] sm:$0xff] %v404
    %445 = vst [vmem:[#allocation2 + $0xd8] sm:$0xff] %v405
    %446 = vst [vmem:[#allocation2 + $0xe0] sm:$0xff] %v406
    %447 = vst [vmem:[#allocation2 + $0xe8] sm:$0xff] %v407
    %448 = vst [vmem:[#allocation2 + $0xf0] sm:$0xff] %v408
    %449 = vst [vmem:[#allocation2 + $0xf8] sm:$0xff] %v409
    %450 = vst [vmem:[#allocation2 + $0x100] sm:$0xff] %v410
    %451 = vst [vmem:[#allocation2 + $0x108] sm:$0xff] %v411
    %452 = vst [vmem:[#allocation2 + $0x110] sm:$0xff] %v412
    %453 = vst [vmem:[#allocation2 + $0x118] sm:$0xff] %v413
    %454 = vst [vmem:[#allocation2 + $0x120] sm:$0xff] %v414
    %455 = vst [vmem:[#allocation2 + $0x128] sm:$0xff] %v415
    %456 = vst [vmem:[#allocation2 + $0x130] sm:$0xff] %v416
    %457 = vst [vmem:[#allocation2 + $0x138] sm:$0xff] %v417
    %v458 = vlaneseq
    %v459 = vshrl.u32 %v458, 7
    %v460 = vadd.s32 %v459, 8
    %v461 = vadd.s32 %v459, 16
    %v462 = vadd.s32 %v459, 24
    %v463 = vadd.s32 %v459, 32
    %v464 = vadd.s32 %v459, 40
    %v465 = vadd.s32 %v459, 48
    %v466 = vadd.s32 %v459, 56
    %v467 = vadd.s32 %v459, 64
    %v468 = vadd.s32 %v459, 72
    %v469 = vadd.s32 %v459, 80
    %v470 = vadd.s32 %v459, 88
    %v471 = vadd.s32 %v459, 96
    %v472 = vadd.s32 %v459, 104
    %v473 = vadd.s32 %v459, 112
    %v474 = vadd.s32 %v459, 120
    %v475 = vadd.s32 %v459, 128
    %v476 = vadd.s32 %v459, 136
    %v477 = vadd.s32 %v459, 144
    %v478 = vadd.s32 %v459, 152
    %s479 = smul.u32 0, 160
    %v480 = vstv %s479
    %v481 = vadd.s32 %v459, %v480
    %v482 = vadd.s32 %v460, %v480
    %v483 = vadd.s32 %v461, %v480
    %v484 = vadd.s32 %v462, %v480
    %v485 = vadd.s32 %v463, %v480
    %v486 = vadd.s32 %v464, %v480
    %v487 = vadd.s32 %v465, %v480
    %v488 = vadd.s32 %v466, %v480
    %v489 = vadd.s32 %v467, %v480
    %v490 = vadd.s32 %v468, %v480
    %v491 = vadd.s32 %v469, %v480
    %v492 = vadd.s32 %v470, %v480
    %v493 = vadd.s32 %v471, %v480
    %v494 = vadd.s32 %v472, %v480
    %v495 = vadd.s32 %v473, %v480
    %v496 = vadd.s32 %v474, %v480
    %v497 = vadd.s32 %v475, %v480
    %v498 = vadd.s32 %v476, %v480
    %v499 = vadd.s32 %v477, %v480
    %v500 = vadd.s32 %v478, %v480
    %vm501 = vcmp.lt.s32.totalorder %v481, 160
    %vm502 = vcmp.lt.s32.totalorder %v482, 160
    %vm503 = vcmp.lt.s32.totalorder %v483, 160
    %vm504 = vcmp.lt.s32.totalorder %v484, 160
    %vm505 = vcmp.lt.s32.totalorder %v485, 160
    %vm506 = vcmp.lt.s32.totalorder %v486, 160
    %vm507 = vcmp.lt.s32.totalorder %v487, 160
    %vm508 = vcmp.lt.s32.totalorder %v488, 160
    %vm509 = vcmp.lt.s32.totalorder %v489, 160
    %vm510 = vcmp.lt.s32.totalorder %v490, 160
    %vm511 = vcmp.lt.s32.totalorder %v491, 160
    %vm512 = vcmp.lt.s32.totalorder %v492, 160
    %vm513 = vcmp.lt.s32.totalorder %v493, 160
    %vm514 = vcmp.lt.s32.totalorder %v494, 160
    %vm515 = vcmp.lt.s32.totalorder %v495, 160
    %vm516 = vcmp.lt.s32.totalorder %v496, 160
    %vm517 = vcmp.lt.s32.totalorder %v497, 160
    %vm518 = vcmp.lt.s32.totalorder %v498, 160
    %vm519 = vcmp.lt.s32.totalorder %v499, 160
    %vm520 = vcmp.lt.s32.totalorder %v500, 160
    %v521 = vsel %vm501, 1, 0
    %v522 = vsel %vm502, 1, 0
    %v523 = vsel %vm503, 1, 0
    %v524 = vsel %vm504, 1, 0
    %v525 = vsel %vm505, 1, 0
    %v526 = vsel %vm506, 1, 0
    %v527 = vsel %vm507, 1, 0
    %v528 = vsel %vm508, 1, 0
    %v529 = vsel %vm509, 1, 0
    %v530 = vsel %vm510, 1, 0
    %v531 = vsel %vm511, 1, 0
    %v532 = vsel %vm512, 1, 0
    %v533 = vsel %vm513, 1, 0
    %v534 = vsel %vm514, 1, 0
    %v535 = vsel %vm515, 1, 0
    %v536 = vsel %vm516, 1, 0
    %v537 = vsel %vm517, 1, 0
    %v538 = vsel %vm518, 1, 0
    %v539 = vsel %vm519, 1, 0
    %v540 = vsel %vm520, 1, 0
    %v541 = vcvt.s32.f32 %v521
    %v542 = vcvt.s32.f32 %v522
    %v543 = vcvt.s32.f32 %v523
    %v544 = vcvt.s32.f32 %v524
    %v545 = vcvt.s32.f32 %v525
    %v546 = vcvt.s32.f32 %v526
    %v547 = vcvt.s32.f32 %v527
    %v548 = vcvt.s32.f32 %v528
    %v549 = vcvt.s32.f32 %v529
    %v550 = vcvt.s32.f32 %v530
    %v551 = vcvt.s32.f32 %v531
    %v552 = vcvt.s32.f32 %v532
    %v553 = vcvt.s32.f32 %v533
    %v554 = vcvt.s32.f32 %v534
    %v555 = vcvt.s32.f32 %v535
    %v556 = vcvt.s32.f32 %v536
    %v557 = vcvt.s32.f32 %v537
    %v558 = vcvt.s32.f32 %v538
    %v559 = vcvt.s32.f32 %v539
    %v560 = vcvt.s32.f32 %v540
    %v561 = vmul.f32 %v378, %v541
    %v562 = vmul.f32 %v379, %v541
    %v563 = vmul.f32 %v380, %v542
    %v564 = vmul.f32 %v381, %v542
    %v565 = vmul.f32 %v382, %v543
    %v566 = vmul.f32 %v383, %v543
    %v567 = vmul.f32 %v384, %v544
    %v568 = vmul.f32 %v385, %v544
    %v569 = vmul.f32 %v386, %v545
    %v570 = vmul.f32 %v387, %v545
    %v571 = vmul.f32 %v388, %v546
    %v572 = vmul.f32 %v389, %v546
    %v573 = vmul.f32 %v390, %v547
    %v574 = vmul.f32 %v391, %v547
    %v575 = vmul.f32 %v392, %v548
    %v576 = vmul.f32 %v393, %v548
    %v577 = vmul.f32 %v394, %v549
    %v578 = vmul.f32 %v395, %v549
    %v579 = vmul.f32 %v396, %v550
    %v580 = vmul.f32 %v397, %v550
    %v581 = vmul.f32 %v398, %v551
    %v582 = vmul.f32 %v399, %v551
    %v583 = vmul.f32 %v400, %v552
    %v584 = vmul.f32 %v401, %v552
    %v585 = vmul.f32 %v402, %v553
    %v586 = vmul.f32 %v403, %v553
    %v587 = vmul.f32 %v404, %v554
    %v588 = vmul.f32 %v405, %v554
    %v589 = vmul.f32 %v406, %v555
    %v590 = vmul.f32 %v407, %v555
    %v591 = vmul.f32 %v408, %v556
    %v592 = vmul.f32 %v409, %v556
    %v593 = vmul.f32 %v410, %v557
    %v594 = vmul.f32 %v411, %v557
    %v595 = vmul.f32 %v412, %v558
    %v596 = vmul.f32 %v413, %v558
    %v597 = vmul.f32 %v414, %v559
    %v598 = vmul.f32 %v415, %v559
    %v599 = vmul.f32 %v416, %v560
    %v600 = vmul.f32 %v417, %v560
    %v601 = vadd.f32 %v561, %v563
    %v602 = vadd.f32 %v601, %v565
    %v603 = vadd.f32 %v602, %v567
    %v604 = vadd.f32 %v603, %v569
    %v605 = vadd.f32 %v604, %v571
    %v606 = vadd.f32 %v605, %v573
    %v607 = vadd.f32 %v606, %v575
    %v608 = vadd.f32 %v607, %v577
    %v609 = vadd.f32 %v608, %v579
    %v610 = vadd.f32 %v609, %v581
    %v611 = vadd.f32 %v610, %v583
    %v612 = vadd.f32 %v611, %v585
    %v613 = vadd.f32 %v612, %v587
    %v614 = vadd.f32 %v613, %v589
    %v615 = vadd.f32 %v614, %v591
    %v616 = vadd.f32 %v615, %v593
    %v617 = vadd.f32 %v616, %v595
    %v618 = vadd.f32 %v617, %v597
    %v619 = vadd.f32 %v618, %v599
    %v620 = vrot.slane %v619, 4
    %v621 = vadd.f32 %v619, %v620
    %v622 = vrot.slane %v621, 2
    %v623 = vadd.f32 %v621, %v622
    %v624 = vrot.slane %v623, 1
    %v625 = vadd.f32 %v623, %v624
    %v626 = vadd.f32 %v562, %v564
    %v627 = vadd.f32 %v626, %v566
    %v628 = vadd.f32 %v627, %v568
    %v629 = vadd.f32 %v628, %v570
    %v630 = vadd.f32 %v629, %v572
    %v631 = vadd.f32 %v630, %v574
    %v632 = vadd.f32 %v631, %v576
    %v633 = vadd.f32 %v632, %v578
    %v634 = vadd.f32 %v633, %v580
    %v635 = vadd.f32 %v634, %v582
    %v636 = vadd.f32 %v635, %v584
    %v637 = vadd.f32 %v636, %v586
    %v638 = vadd.f32 %v637, %v588
    %v639 = vadd.f32 %v638, %v590
    %v640 = vadd.f32 %v639, %v592
    %v641 = vadd.f32 %v640, %v594
    %v642 = vadd.f32 %v641, %v596
    %v643 = vadd.f32 %v642, %v598
    %v644 = vadd.f32 %v643, %v600
    %v645 = vrot.slane %v644, 4
    %v646 = vadd.f32 %v644, %v645
    %v647 = vrot.slane %v646, 2
    %v648 = vadd.f32 %v646, %v647
    %v649 = vrot.slane %v648, 1
    %v650 = vadd.f32 %v648, %v649
    %v651 = vmul.f32 %v561, %v378
    %v652 = vmul.f32 %v562, %v379
    %v653 = vmul.f32 %v563, %v380
    %v654 = vmul.f32 %v564, %v381
    %v655 = vmul.f32 %v565, %v382
    %v656 = vmul.f32 %v566, %v383
    %v657 = vmul.f32 %v567, %v384
    %v658 = vmul.f32 %v568, %v385
    %v659 = vmul.f32 %v569, %v386
    %v660 = vmul.f32 %v570, %v387
    %v661 = vmul.f32 %v571, %v388
    %v662 = vmul.f32 %v572, %v389
    %v663 = vmul.f32 %v573, %v390
    %v664 = vmul.f32 %v574, %v391
    %v665 = vmul.f32 %v575, %v392
    %v666 = vmul.f32 %v576, %v393
    %v667 = vmul.f32 %v577, %v394
    %v668 = vmul.f32 %v578, %v395
    %v669 = vmul.f32 %v579, %v396
    %v670 = vmul.f32 %v580, %v397
    %v671 = vmul.f32 %v581, %v398
    %v672 = vmul.f32 %v582, %v399
    %v673 = vmul.f32 %v583, %v400
    %v674 = vmul.f32 %v584, %v401
    %v675 = vmul.f32 %v585, %v402
    %v676 = vmul.f32 %v586, %v403
    %v677 = vmul.f32 %v587, %v404
    %v678 = vmul.f32 %v588, %v405
    %v679 = vmul.f32 %v589, %v406
    %v680 = vmul.f32 %v590, %v407
    %v681 = vmul.f32 %v591, %v408
    %v682 = vmul.f32 %v592, %v409
    %v683 = vmul.f32 %v593, %v410
    %v684 = vmul.f32 %v594, %v411
    %v685 = vmul.f32 %v595, %v412
    %v686 = vmul.f32 %v596, %v413
    %v687 = vmul.f32 %v597, %v414
    %v688 = vmul.f32 %v598, %v415
    %v689 = vmul.f32 %v599, %v416
    %v690 = vmul.f32 %v600, %v417
    %v691 = vadd.f32 %v651, %v653
    %v692 = vadd.f32 %v691, %v655
    %v693 = vadd.f32 %v692, %v657
    %v694 = vadd.f32 %v693, %v659
    %v695 = vadd.f32 %v694, %v661
    %v696 = vadd.f32 %v695, %v663
    %v697 = vadd.f32 %v696, %v665
    %v698 = vadd.f32 %v697, %v667
    %v699 = vadd.f32 %v698, %v669
    %v700 = vadd.f32 %v699, %v671
    %v701 = vadd.f32 %v700, %v673
    %v702 = vadd.f32 %v701, %v675
    %v703 = vadd.f32 %v702, %v677
    %v704 = vadd.f32 %v703, %v679
    %v705 = vadd.f32 %v704, %v681
    %v706 = vadd.f32 %v705, %v683
    %v707 = vadd.f32 %v706, %v685
    %v708 = vadd.f32 %v707, %v687
    %v709 = vadd.f32 %v708, %v689
    %v710 = vrot.slane %v709, 4
    %v711 = vadd.f32 %v709, %v710
    %v712 = vrot.slane %v711, 2
    %v713 = vadd.f32 %v711, %v712
    %v714 = vrot.slane %v713, 1
    %v715 = vadd.f32 %v713, %v714
    %v716 = vadd.f32 %v652, %v654
    %v717 = vadd.f32 %v716, %v656
    %v718 = vadd.f32 %v717, %v658
    %v719 = vadd.f32 %v718, %v660
    %v720 = vadd.f32 %v719, %v662
    %v721 = vadd.f32 %v720, %v664
    %v722 = vadd.f32 %v721, %v666
    %v723 = vadd.f32 %v722, %v668
    %v724 = vadd.f32 %v723, %v670
    %v725 = vadd.f32 %v724, %v672
    %v726 = vadd.f32 %v725, %v674
    %v727 = vadd.f32 %v726, %v676
    %v728 = vadd.f32 %v727, %v678
    %v729 = vadd.f32 %v728, %v680
    %v730 = vadd.f32 %v729, %v682
    %v731 = vadd.f32 %v730, %v684
    %v732 = vadd.f32 %v731, %v686
    %v733 = vadd.f32 %v732, %v688
    %v734 = vadd.f32 %v733, %v690
    %v735 = vrot.slane %v734, 4
    %v736 = vadd.f32 %v734, %v735
    %v737 = vrot.slane %v736, 2
    %v738 = vadd.f32 %v736, %v737
    %v739 = vrot.slane %v738, 1
    %v740 = vadd.f32 %v738, %v739
    %vm741 = vcmask 1040384
    %v742 = vsel %vm741, %v625, %v715
    %v743 = vsel %vm741, %v650, %v740
    %v746 = vcombine.low %v742, %v743
    %v748 = vunpack.c.l.s4 1983009808
    %v749 = vunpack.c.0.s8 %v748
    %v750 = vlaneseq
    %v751 = vshrl.u32 %v750, 7
    %v752 = vsub.s32 %v749, %v751
    %v753 = vrot.slane %v746, %v752
    %755 = vst [vmem:[#allocation4] sm:$0xf] %v753
    // Predicated region
    $region14: #{tpu_custom_call.1} parent=1 // pred_check
      _
    $region15: #{tpu_custom_call.1} parent=1 // pred_check_branch
      %757 = sbr.rel (0) target = $region17
    $region16: #{tpu_custom_call.1} parent=1 // pred_region
      %s759 = ssub.s32 5120, 5120
      %760 = vsyncadd [#allocation3], %s759
      %s761 = sshll.u32 [#allocation2], 4
      %s762 = int_to_ptr.vmem [resolvable:$true] %s761
      %767 = dma.vmem_to_hbm [thread:$0]  %s762, 5120, %s3, [#allocation3], 256, 256, 16
    $region17: #{tpu_custom_call.1} parent=1 // pred_fallthru
      _
    // Predicated region
    $region18: #{tpu_custom_call.1} parent=1 // pred_check
      _
    $region19: #{tpu_custom_call.1} parent=1 // pred_check_branch
      %769 = sbr.rel (0) target = $region21
    $region20: #{tpu_custom_call.1} parent=1 // pred_region
      %s771 = ssub.s32 64, 64
      %772 = vsyncadd [#allocation5], %s771
      %s774 = sshll.u32 [#allocation4], 4
      %s775 = int_to_ptr.vmem [resolvable:$true] %s774
      %777 = dma.vmem_to_hbm [thread:$0]  %s775, 64, %s4, [#allocation5]
    $region21: #{tpu_custom_call.1} parent=1 // pred_fallthru
      _
    // Predicated region
    $region22: #{tpu_custom_call.1} parent=1 // pred_check
      _
    $region23: #{tpu_custom_call.1} parent=1 // pred_check_branch
      %779 = sbr.rel (0) target = $region25
    $region24: #{tpu_custom_call.1} parent=1 // pred_region
      %780 = dma.done [#allocation3], 5120
    $region25: #{tpu_custom_call.1} parent=1 // pred_fallthru
      _
    // Predicated region
    $region26: #{tpu_custom_call.1} parent=1 // pred_check
      _
    $region27: #{tpu_custom_call.1} parent=1 // pred_check_branch
      %782 = sbr.rel (0) target = $region29
    $region28: #{tpu_custom_call.1} parent=1 // pred_region
      %783 = dma.done [#allocation5], 64
    $region29: #{tpu_custom_call.1} parent=1 // pred_fallthru
      _
    %784 = vsyncpa [#allocation3], 1
    %785 = vsyncpa [#allocation5], 1

</llo_original>
